<compile_context>
chip_gen: v5e
topology: v5e:2x2
jax: 0.10.0
libtpu: 0.0.40
codegen_flags: <defaults>
</compile_context>

<pallas_src>
import math
import jax
import jax.numpy as jnp
from jax.experimental import pallas as pl
from jax.experimental.pallas import tpu as pltpu


# --------------------------------------------------------------------------- #
# Helpers
# --------------------------------------------------------------------------- #
def _round_up(x: int, m: int) -> int:
    return ((x + m - 1) // m) * m


def _sublane_quantum(dtype) -> int:
    """Minimum sublane tile multiple for a dtype: f32->8, bf16->16, int8/fp8->32."""
    bits = jnp.dtype(dtype).itemsize * 8
    return max(8, 256 // bits)


def _vmem_capacity_bytes() -> int:
    try:
        return int(pltpu.get_tpu_info().vmem_capacity_bytes)
    except Exception:
        return 64 << 20  # conservative default (v7x per-TC VMEM)


def _pick_tile(dim_padded: int, target: int, quantum: int) -> int:
    """Largest quantum-multiple tile <= target, preferring divisors of dim_padded
    (avoids tile-sized padding) but not shrinking below target//2 for it."""
    t = _round_up(min(target, dim_padded), quantum)
    if dim_padded % t == 0:
        return t
    floor = max(quantum, t // 2)
    cand = t
    while cand >= floor:
        if dim_padded % cand == 0:
            return cand
        cand -= quantum
    return t


def _auto_tiles(M, N, K, x_dtype, w_dtype, out_dtype, vmem_cap):
    sub = _sublane_quantum(x_dtype)
    bx = jnp.dtype(x_dtype).itemsize
    bw = jnp.dtype(w_dtype).itemsize
    bo = jnp.dtype(out_dtype).itemsize

    Mq = _round_up(M, sub)
    Nq = _round_up(N, 128)
    Kq = _round_up(K, 128)

    # Per-generation VMEM budget: <=48 MiB, and <=60% of physical VMEM (v7x: 64 MiB).
    budget = min(48 << 20, int(vmem_cap * 0.6))

    # Narrow dtypes halve HBM traffic -> push tiles wider for arithmetic intensity.
    wide = bx <= 2
    tm_target = 1024 if wide else 512
    tn_target = 1024 if wide else 512
    tk_target = 2048 if wide else 1024

    # Small-batch regime: keep x fully resident along M; grow K/N tiles instead.
    tm = Mq if Mq <= tm_target else _pick_tile(Mq, tm_target, sub)
    tn = _pick_tile(Nq, tn_target, 128)
    tk = _pick_tile(Kq, tk_target, 128)

    # Megacore (v7x has 2 TCs): keep >=2 blocks on a parallel axis when possible.
    if (Mq // tm) == 1 and (Nq // tn) == 1 and Nq >= 256:
        tn = _pick_tile(Nq, max(128, Nq // 2), 128)

    def footprint(tm_, tn_, tk_):
        need = 2 * (tm_ * tk_ * bx + tk_ * tn_ * bw + tm_ * tn_ * bo)  # double-buffered
        if jnp.dtype(out_dtype) != jnp.dtype(jnp.float32):
            need += tm_ * tn_ * 4  # f32 accumulator scratch
        return need

    # Shrink (tk first, then tn, then tm) until the footprint fits the budget.
    while footprint(tm, tn, tk) > budget:
        if tk > 512 and tk >= tn and tk >= tm:
            tk = _pick_tile(Kq, max(128, tk // 2), 128)
        elif tn >= tm and tn > 128:
            tn = _pick_tile(Nq, max(128, tn // 2), 128)
        elif tm > sub:
            tm = _pick_tile(Mq, max(sub, tm // 2), sub)
        else:
            break
    return tm, tn, tk


# --------------------------------------------------------------------------- #
# Kernels
# --------------------------------------------------------------------------- #
def _linear_kernel_f32out(x_ref, w_ref, b_ref, o_ref):
    """float32 output: accumulate directly into the K-resident output block."""
    k = pl.program_id(2)

    @pl.when(k == 0)
    def _():
        o_ref[...] = jnp.broadcast_to(b_ref[...], o_ref.shape).astype(o_ref.dtype)

    o_ref[...] += jnp.dot(x_ref[...], w_ref[...], preferred_element_type=jnp.float32)


def _linear_kernel_acc(x_ref, w_ref, b_ref, o_ref, acc_ref):
    """Low-precision output: float32 VMEM accumulator, bias + cast at last K step."""
    k = pl.program_id(2)

    @pl.when(k == 0)
    def _():
        acc_ref[...] = jnp.zeros_like(acc_ref)

    acc_ref[...] += jnp.dot(x_ref[...], w_ref[...], preferred_element_type=jnp.float32)

    @pl.when(k == pl.num_programs(2) - 1)
    def _():
        o_ref[...] = (acc_ref[...] + b_ref[...].astype(jnp.float32)).astype(o_ref.dtype)


# --------------------------------------------------------------------------- #
# Wrapper
# --------------------------------------------------------------------------- #
def linear_fa_forward(x, weight, bias=None, *, tm=None, tn=None, tk=None):
    """x: (M, in_features); weight: (out_features, in_features); bias: (out_features,).

    Returns x @ weight.T + bias, shape (M, out_features), dtype of x.
    """
    M, K = x.shape
    N, K2 = weight.shape
    assert K == K2, "in_features mismatch between x and weight"
    out_dtype = x.dtype
    if bias is None:
        bias = jnp.zeros((N,), dtype=out_dtype)

    sub = _sublane_quantum(x.dtype)
    vmem_cap = _vmem_capacity_bytes()

    if tm is None or tn is None or tk is None:
        a_tm, a_tn, a_tk = _auto_tiles(M, N, K, x.dtype, weight.dtype, out_dtype, vmem_cap)
        tm = a_tm if tm is None else tm
        tn = a_tn if tn is None else tn
        tk = a_tk if tk is None else tk

    # Clamp explicit tiles to (padded) problem size with dtype-aware alignment.
    tm = _round_up(min(tm, _round_up(M, sub)), sub)
    tn = _round_up(min(tn, _round_up(N, 128)), 128)
    tk = _round_up(min(tk, _round_up(K, 128)), 128)

    Mp, Np, Kp = _round_up(M, tm), _round_up(N, tn), _round_up(K, tk)

    # Pad inputs in plain-JAX glue (zeros contribute nothing to the matmul).
    xp = x if (Mp == M and Kp == K) else jnp.pad(x, ((0, Mp - M), (0, Kp - K)))
    # One-time (N, K) -> (K, N) transpose in HBM (fuses with the pad); amortized
    # over Mp/tm re-uses and keeps the kernel free of per-step relayouts.
    wt = weight.T
    wtp = wt if (Kp == K and Np == N) else jnp.pad(wt, ((0, Kp - K), (0, Np - N)))
    bp = bias if Np == N else jnp.pad(bias, (0, Np - N))
    b2d = bp.reshape(1, Np)

    grid = (Mp // tm, Np // tn, Kp // tk)

    bx = jnp.dtype(x.dtype).itemsize
    bw = jnp.dtype(weight.dtype).itemsize
    bo = jnp.dtype(out_dtype).itemsize
    f32_out = jnp.dtype(out_dtype) == jnp.dtype(jnp.float32)

    # Truthful memory-traffic estimate: x re-streamed per N-block, W per M-block.
    cost = pl.CostEstimate(
        flops=2 * Mp * Np * Kp,
        transcendentals=0,
        bytes_accessed=(Mp * Kp * bx * grid[1]
                        + Kp * Np * bw * grid[0]
                        + Mp * Np * bo
                        + Np * jnp.dtype(bias.dtype).itemsize),
    )

    # Raise the scoped VMEM limit to match the tiles (v5e default is only 16 MiB).
    needed = 2 * (tm * tk * bx + tk * tn * bw + tm * tn * bo) + (0 if f32_out else tm * tn * 4)
    vmem_limit = min(max(needed + (4 << 20), 32 << 20), vmem_cap)

    in_specs = [
        pl.BlockSpec((tm, tk), lambda i, j, k: (i, k)),   # x tile
        pl.BlockSpec((tk, tn), lambda i, j, k: (k, j)),   # W^T tile (K, N layout)
        pl.BlockSpec((1, tn), lambda i, j, k: (0, j)),    # bias tile
    ]
    out_spec = pl.BlockSpec((tm, tn), lambda i, j, k: (i, j))

    kernel = _linear_kernel_f32out if f32_out else _linear_kernel_acc
    scratch = [] if f32_out else [pltpu.VMEM((tm, tn), jnp.float32)]

    out = pl.pallas_call(
        kernel,
        out_shape=jax.ShapeDtypeStruct((Mp, Np), out_dtype),
        grid_spec=pltpu.PrefetchScalarGridSpec(
            num_scalar_prefetch=0,
            grid=grid,
            in_specs=in_specs,
            out_specs=out_spec,
            scratch_shapes=scratch,
        ),
        compiler_params=pltpu.CompilerParams(
            dimension_semantics=("parallel", "parallel", "arbitrary"),
            vmem_limit_bytes=int(vmem_limit),
        ),
        cost_estimate=cost,
    )(xp, wtp, b2d)

    if Mp != M or Np != N:
        out = out[:M, :N]
    return out


# --------------------------------------------------------------------------- #
# Parameter init mirroring LinearFA.reset_parameters (kaiming_uniform, a=sqrt(5))
# --------------------------------------------------------------------------- #
def init_linear_fa_params(key, in_features, out_features, dtype=jnp.float32):
    k_w, k_wfa, k_b = jax.random.split(key, 3)
    a = math.sqrt(5.0)
    fan_in = in_features
    gain = math.sqrt(2.0 / (1.0 + a * a))
    w_bound = gain * math.sqrt(3.0 / fan_in)
    weight = jax.random.uniform(k_w, (out_features, in_features), dtype,
                                minval=-w_bound, maxval=w_bound)
    # weight_fa is only used by the backward hook (feedback alignment); forward-unused.
    weight_fa = jax.random.uniform(k_wfa, (out_features, in_features), dtype,
                                   minval=-w_bound, maxval=w_bound)
    b_bound = 1.0 / math.sqrt(fan_in)
    bias = jax.random.uniform(k_b, (out_features,), dtype,
                              minval=-b_bound, maxval=b_bound)
    return weight, weight_fa, bias


# TODO(synk): the feedback-alignment backward hook (grad_input = grad_output @ weight_fa)
# is a custom-VJP concern, not part of the forward kernel.

if __name__ == "__main__":
    key = jax.random.PRNGKey(0)
    k_x, k_p = jax.random.split(key)

    batch, in_features, out_features = 16, 256, 256
    x = jax.random.normal(k_x, (batch, in_features), jnp.float32)
    weight, weight_fa, bias = init_linear_fa_params(k_p, in_features, out_features)

    ref = x @ weight.T + bias

    # 1) Auto-tiled f32 path (accumulates directly into the resident output block).
    out_auto = jax.block_until_ready(linear_fa_forward(x, weight, bias))
    assert out_auto.shape == (batch, out_features)
    assert jnp.allclose(out_auto, ref, atol=2e-4, rtol=2e-5), "auto-tiled f32 kernel mismatch"

    # 2) Explicit small tiles -> multi-step K grid (exercises K-axis accumulation).
    out_tiled = jax.block_until_ready(linear_fa_forward(x, weight, bias, tm=8, tn=128, tk=128))
    assert jnp.allclose(out_tiled, ref, atol=2e-4, rtol=2e-5), "tiled f32 kernel mismatch"

    # 3) bf16 operands -> f32 accumulator-scratch path (dtype-aware sublane quantum).
    xb = x.astype(jnp.bfloat16)
    wb = weight.astype(jnp.bfloat16)
    bb = bias.astype(jnp.bfloat16)
    out_bf16 = jax.block_until_ready(linear_fa_forward(xb, wb, bb))
    assert out_bf16.dtype == jnp.bfloat16
    assert jnp.allclose(out_bf16.astype(jnp.float32), ref, atol=6e-2, rtol=6e-2), \
        "bf16 kernel mismatch"

    print("KERNEL_OK")
</pallas_src>

<mosaic_0001>
module attributes {stable_mosaic.version = 11 : i64} {
  func.func @_linear_kernel_f32out(%arg0: i32, %arg1: i32, %arg2: i32, %arg3: memref<16x256xf32, #tpu.memory_space<vmem>>, %arg4: memref<256x128xf32, #tpu.memory_space<vmem>>, %arg5: memref<1x128xf32, #tpu.memory_space<vmem>>, %arg6: memref<16x128xf32, #tpu.memory_space<vmem>>) attributes {dimension_semantics = [#tpu.dimension_semantics<parallel>, #tpu.dimension_semantics<parallel>, #tpu.dimension_semantics<arbitrary>], iteration_bounds = array<i64: 1, 2, 1>, scalar_prefetch = 0 : i64, scratch_operands = 0 : i64, tpu.core_type = #tpu.core_type<tc>, window_params = [{transform_indices = @transform_0, window_bounds = array<i64: 16, 256>}, {transform_indices = @transform_1, window_bounds = array<i64: 256, 128>}, {transform_indices = @transform_2, window_bounds = array<i64: 1, 128>}, {transform_indices = @transform_3, window_bounds = array<i64: 16, 128>}]} {
    %c0_i32 = arith.constant 0 : i32
    %0 = arith.cmpi eq, %arg2, %c0_i32 : i32
    %1 = arith.extui %0 : i1 to i32
    %c0_i32_0 = arith.constant 0 : i32
    %2 = arith.cmpi ne, %1, %c0_i32_0 : i32
    scf.if %2 {
      %c0_8 = arith.constant 0 : index
      %c0_9 = arith.constant 0 : index
      %9 = vector.load %arg5[%c0_8, %c0_9] : memref<1x128xf32, #tpu.memory_space<vmem>>, vector<1x128xf32>
      %10 = vector.shape_cast %9 : vector<1x128xf32> to vector<1x128xf32>
      %11 = vector.broadcast %10 : vector<1x128xf32> to vector<16x128xf32>
      %c0_10 = arith.constant 0 : index
      %c0_11 = arith.constant 0 : index
      %12 = vector.load %arg6[%c0_10, %c0_11] : memref<16x128xf32, #tpu.memory_space<vmem>>, vector<16x128xf32>
      tpu.vector_store %arg6[%c0_10, %c0_11], %11 {strides = array<i32>} : memref<16x128xf32, #tpu.memory_space<vmem>>, vector<16x128xf32>,
    } else {
    }
    %c0 = arith.constant 0 : index
    %c0_1 = arith.constant 0 : index
    %3 = vector.load %arg6[%c0, %c0_1] : memref<16x128xf32, #tpu.memory_space<vmem>>, vector<16x128xf32>
    %c0_2 = arith.constant 0 : index
    %c0_3 = arith.constant 0 : index
    %4 = vector.load %arg3[%c0_2, %c0_3] : memref<16x256xf32, #tpu.memory_space<vmem>>, vector<16x256xf32>
    %c0_4 = arith.constant 0 : index
    %c0_5 = arith.constant 0 : index
    %5 = vector.load %arg4[%c0_4, %c0_5] : memref<256x128xf32, #tpu.memory_space<vmem>>, vector<256x128xf32>
    %cst = arith.constant dense<0.000000e+00> : vector<16x128xf32>
    %6 = tpu.matmul %4, %5, %cst {dimension_numbers = #tpu.dot_dimension_numbers<[1], [0], [0], [1], [0, 0, 1, 1], [], []>} : vector<16x256xf32>, vector<256x128xf32>, vector<16x128xf32> -> vector<16x128xf32>
    %7 = arith.addf %3, %6 : vector<16x128xf32>
    %c0_6 = arith.constant 0 : index
    %c0_7 = arith.constant 0 : index
    %8 = vector.load %arg6[%c0_6, %c0_7] : memref<16x128xf32, #tpu.memory_space<vmem>>, vector<16x128xf32>
    tpu.vector_store %arg6[%c0_6, %c0_7], %7 {strides = array<i32>} : memref<16x128xf32, #tpu.memory_space<vmem>>, vector<16x128xf32>,
    return
  }
  func.func @transform_0(%arg0: i32, %arg1: i32, %arg2: i32) -> (i32, i32) {
    %c0_i32 = arith.constant 0 : i32
    return %arg0, %arg2 : i32, i32
  }
  func.func @transform_1(%arg0: i32, %arg1: i32, %arg2: i32) -> (i32, i32) {
    %c0_i32 = arith.constant 0 : i32
    return %arg2, %arg1 : i32, i32
  }
  func.func @transform_2(%arg0: i32, %arg1: i32, %arg2: i32) -> (i32, i32) {
    %c0_i32 = arith.constant 0 : i32
    %c0_i32_0 = arith.constant 0 : i32
    return %c0_i32, %arg1 : i32, i32
  }
  func.func @transform_3(%arg0: i32, %arg1: i32, %arg2: i32) -> (i32, i32) {
    %c0_i32 = arith.constant 0 : i32
    return %arg0, %arg1 : i32, i32
  }
}

</mosaic_0001>

<llo_original>
// kernel: tpu_custom_call.1
$region0: #{tpu_custom_call.1}
  #allocation0 [shape = 'u32[]', space=smem, size = 0x4, offset = 0x4, fixed_abs, tag = 'smem constant byte address 0x4 - core index']
  #allocation1 [shape = 'u32[72,128]{1,0:T(1,128)}', space=vmem, size = 0x9000, scoped, tag = 'internal scratch']
  %s0 = inlined_call_operand.hbm [shape: f32[16,256], index: 0, kind: input, shape index: {}]
  %s1 = inlined_call_operand.hbm [shape: f32[256,256], index: 1, kind: input, shape index: {}]
  %s2 = inlined_call_operand.hbm [shape: f32[1,256], index: 2, kind: input, shape index: {}]
  %s3 = inlined_call_operand.hbm [shape: f32[16,256], index: 3, kind: output, shape index: {}]
  %s4 = sld [smem:[#allocation0]]
  $region61: #{tpu_custom_call.1} parent=0
    _
  %s6 = ssub.s32 1, %s4
  %s7 = scalar_select 0, %s6, %s4
  $region1: #{tpu_custom_call.1} parent=0
    #allocation2 [shape = 'u8[16384]{0}', space=vmem, size = 0x4000, scoped, tag = 'input window, operand 0, single buffered']
    #allocation3 [shape = 's32[2]{0}', space=sflag, size = 0x8, scoped, tag = 'scoped memory for tpu_custom_call.1']
    #allocation4 [shape = 's32[2]{0}', space=sflag, size = 0x8, scoped, tag = 'scoped memory for tpu_custom_call.1']
    #allocation5 [shape = 'u8[262144]{0}', space=vmem, size = 0x40000, scoped, tag = 'input window, operand 1']
    #allocation6 [shape = 's32[2]{0}', space=sflag, size = 0x8, scoped, tag = 'scoped memory for tpu_custom_call.1']
    #allocation7 [shape = 'u8[1024]{0}', space=vmem, size = 0x400, scoped, tag = 'input window, operand 2']
    #allocation8 [shape = 'u8[16384]{0}', space=vmem, size = 0x4000, scoped, tag = 'output window, operand 0']
    %8 = vsyncpa [#allocation3], 0
    %9 = vsyncpa [#allocation6], 0
    %s10 = scalar_lea.sflag [#allocation6], 1
    %11 = vsyncpa %s10, 0
    %12 = vsyncpa [#allocation4], 0
    %s13 = scalar_lea.sflag [#allocation4], 1
    %14 = vsyncpa %s13, 0
    loop: start=0, step=1, limit=4
    $region2: #{tpu_custom_call.1} parent=1 // loop_pre_header
      _
    $region3: #{tpu_custom_call.1} parent=1 // loop_header
      %s16 = sphi 0, %s20
      %p17 = scmp.ge.s32.totalorder %s16, 4
      %s23 = sphi 0, %s42
      %s24 = sphi 0, %s38
      %s25 = sphi 0, %s34
      %s26 = sphi 0, %s23
      %s27 = sphi 0, %s24
      %s28 = sphi 0, %s25
      %s29 = sphi 0, %s26
      %s30 = sphi 0, %s27
      %s31 = sphi 0, %s28
      %s47 = sphi 0, %s49
      %s50 = sphi 0, %s47
      %s51 = sphi 0, %s50
      %s67 = sphi 0, %s51
      %s75 = sphi 0, %s77
      %s78 = sphi 0, %s75
      %s79 = sphi 0, %s78
      %s95 = sphi 0, %s79
      %s101 = sphi 0, %s103
      %s104 = sphi 0, %s101
      %s105 = sphi 0, %s104
      %s121 = sphi 0, %s105
      %s129 = sphi 0, %s131
      %s132 = sphi 0, %s129
      %s133 = sphi 0, %s132
      %s149 = sphi 0, %s133
    $region4: #{tpu_custom_call.1} parent=1 // loop_header_branch
      %19 = sbr.rel (%p17) target = $region8
    $region5: #{tpu_custom_call.1} parent=1 // loop_body
      %s21 = ssub.s32 %s16, 1
      %s22 = ssub.s32 %s16, 2
      %s32 = sadd.s32 1, %s25
      %p33 = scmp.ge.s32.totalorder %s32, 1
      %s34 = scalar_select %p33, 0, %s32
      %s35 = sadd.s32 1, %s24
      %s36 = scalar_select %p33, %s35, %s24
      %p37 = scmp.ge.s32.totalorder %s36, 2
      %s38 = scalar_select %p37, 0, %s36
      %s39 = sadd.s32 1, %s23
      %s40 = scalar_select %p37, %s39, %s23
      %p41 = scmp.ge.s32.totalorder %s40, 1
      %s42 = scalar_select %p41, 0, %s40
      %s43 = ssub.s32 %s23, %s42
      %s44 = ssub.s32 %s25, %s34
      %s45 = sor.u32 %s43, %s44
      %p46 = scmp.eq.s32.totalorder %s45, 0
      %s48 = sadd.s32 %s47, 1
      %s49 = scalar_select %p46, %s47, %s48
      %p52 = pneg %p46
      %p53 = scmp.eq.s32.totalorder %s16, 1
      %p54 = por %p52, %p53
      %p55 = scmp.ne.s32.totalorder %s47, %s50
      %p56 = scmp.eq.s32.totalorder %s16, 0
      %p57 = por %p55, %p56
      %p58 = scmp.ne.s32.totalorder %s47, %s50
      %p59 = scmp.eq.s32.totalorder %s21, 1
      %p60 = por %p58, %p59
      %p61 = scmp.ne.s32.totalorder %s50, %s51
      %p62 = scmp.eq.s32.totalorder %s21, 0
      %p63 = por %p61, %p62
      %p64 = scmp.ne.s32.totalorder %s50, %s51
      %p65 = scmp.eq.s32.totalorder %s22, 1
      %p66 = por %p64, %p65
      %p68 = scmp.ne.s32.totalorder %s51, %s67
      %p69 = scmp.eq.s32.totalorder %s22, 0
      %p70 = por %p68, %p69
      %s71 = ssub.s32 %s25, %s34
      %s72 = ssub.s32 %s24, %s38
      %s73 = sor.u32 %s71, %s72
      %p74 = scmp.eq.s32.totalorder %s73, 0
      %s76 = sadd.s32 %s75, 1
      %s77 = scalar_select %p74, %s75, %s76
      %p80 = pneg %p74
      %p81 = scmp.eq.s32.totalorder %s16, 1
      %p82 = por %p80, %p81
      %p83 = scmp.ne.s32.totalorder %s75, %s78
      %p84 = scmp.eq.s32.totalorder %s16, 0
      %p85 = por %p83, %p84
      %p86 = scmp.ne.s32.totalorder %s75, %s78
      %p87 = scmp.eq.s32.totalorder %s21, 1
      %p88 = por %p86, %p87
      %p89 = scmp.ne.s32.totalorder %s78, %s79
      %p90 = scmp.eq.s32.totalorder %s21, 0
      %p91 = por %p89, %p90
      %p92 = scmp.ne.s32.totalorder %s78, %s79
      %p93 = scmp.eq.s32.totalorder %s22, 1
      %p94 = por %p92, %p93
      %p96 = scmp.ne.s32.totalorder %s79, %s95
      %p97 = scmp.eq.s32.totalorder %s22, 0
      %p98 = por %p96, %p97
      %s99 = ssub.s32 %s24, %s38
      %p100 = scmp.eq.s32.totalorder %s99, 0
      %s102 = sadd.s32 %s101, 1
      %s103 = scalar_select %p100, %s101, %s102
      %p106 = pneg %p100
      %p107 = scmp.eq.s32.totalorder %s16, 1
      %p108 = por %p106, %p107
      %p109 = scmp.ne.s32.totalorder %s101, %s104
      %p110 = scmp.eq.s32.totalorder %s16, 0
      %p111 = por %p109, %p110
      %p112 = scmp.ne.s32.totalorder %s101, %s104
      %p113 = scmp.eq.s32.totalorder %s21, 1
      %p114 = por %p112, %p113
      %p115 = scmp.ne.s32.totalorder %s104, %s105
      %p116 = scmp.eq.s32.totalorder %s21, 0
      %p117 = por %p115, %p116
      %p118 = scmp.ne.s32.totalorder %s104, %s105
      %p119 = scmp.eq.s32.totalorder %s22, 1
      %p120 = por %p118, %p119
      %p122 = scmp.ne.s32.totalorder %s105, %s121
      %p123 = scmp.eq.s32.totalorder %s22, 0
      %p124 = por %p122, %p123
      %s125 = ssub.s32 %s23, %s42
      %s126 = ssub.s32 %s24, %s38
      %s127 = sor.u32 %s125, %s126
      %p128 = scmp.eq.s32.totalorder %s127, 0
      %s130 = sadd.s32 %s129, 1
      %s131 = scalar_select %p128, %s129, %s130
      %p134 = pneg %p128
      %p135 = scmp.eq.s32.totalorder %s16, 1
      %p136 = por %p134, %p135
      %p137 = scmp.ne.s32.totalorder %s129, %s132
      %p138 = scmp.eq.s32.totalorder %s16, 0
      %p139 = por %p137, %p138
      %p140 = scmp.ne.s32.totalorder %s129, %s132
      %p141 = scmp.eq.s32.totalorder %s21, 1
      %p142 = por %p140, %p141
      %p143 = scmp.ne.s32.totalorder %s132, %s133
      %p144 = scmp.eq.s32.totalorder %s21, 0
      %p145 = por %p143, %p144
      %p146 = scmp.ne.s32.totalorder %s132, %s133
      %p147 = scmp.eq.s32.totalorder %s22, 1
      %p148 = por %p146, %p147
      %p150 = scmp.ne.s32.totalorder %s133, %s149
      %p151 = scmp.eq.s32.totalorder %s22, 0
      %p152 = por %p150, %p151
      %p153 = scmp.le.s32.totalorder 1, %s16
      %p154 = scmp.lt.s32.totalorder %s16, 3
      %p155 = pnand %p153, %p154
      %p156 = pneg %p155
      // Predicated region
      $region9: #{tpu_custom_call.1} parent=5 // pred_check
        _
      $region10: #{tpu_custom_call.1} parent=5 // pred_check_branch
        %158 = sbr.rel (%p155) target = $region12
      $region11: #{tpu_custom_call.1} parent=5 // pred_region
        %s159 = ssub.s32 %s16, 1
        // Predicated region
        $region13: #{tpu_custom_call.1} parent=11 // pred_check
          %p160 = pneg %p63
        $region14: #{tpu_custom_call.1} parent=11 // pred_check_branch
          %162 = sbr.rel (%p160) target = $region16
        $region15: #{tpu_custom_call.1} parent=11 // pred_region
          %s163 = smul.u32 2, %s26
          %s164 = smul.u32 2, %s28
          %166 = vsyncadd [#allocation3], 0
          %s167 = smul.addr %s163, 2
          %s168 = sadd.s32 %s164, %s167
          %s169 = smul.addr %s168, 8
          %s170 = scalar_lea.hbm %s0, %s169
          %s171 = sshll.u32 %s170, 4
          %s172 = int_to_ptr.hbm [resolvable:$true] %s171
          %s173 = sshll.u32 [#allocation2], 4
          %s174 = int_to_ptr.vmem [resolvable:$true] %s173
          %179 = dma.hbm_to_vmem [thread:$0]  %s172, 512, %s174, [#allocation3], 256, 256, 16
        $region16: #{tpu_custom_call.1} parent=11 // pred_fallthru
          _
      $region12: #{tpu_custom_call.1} parent=5 // pred_fallthru
        _
      %p180 = scmp.lt.s32.totalorder %s16, 2
      // Predicated region
      $region17: #{tpu_custom_call.1} parent=5 // pred_check
        %p181 = pneg %p180
      $region18: #{tpu_custom_call.1} parent=5 // pred_check_branch
        %183 = sbr.rel (%p181) target = $region20
      $region19: #{tpu_custom_call.1} parent=5 // pred_region
        // Predicated region
        $region21: #{tpu_custom_call.1} parent=19 // pred_check
          %p184 = pneg %p85
        $region22: #{tpu_custom_call.1} parent=19 // pred_check_branch
          %186 = sbr.rel (%p184) target = $region24
        $region23: #{tpu_custom_call.1} parent=19 // pred_region
          %s187 = sand.u32 %s16, 1
          %s188 = scalar_lea.sflag [#allocation6], %s187
          %s189 = sand.u32 %s75, 1
          %s190 = smul.addr %s189, 256
          %s191 = scalar_lea.vmem [#allocation5], %s190
          %s192 = smul.u32 32, %s25
          %194 = vsyncadd %s188, 0
          %s195 = smul.addr %s192, 2
          %s196 = sadd.s32 %s24, %s195
          %s197 = smul.addr %s196, 8
          %s198 = scalar_lea.hbm %s1, %s197
          %s199 = sshll.u32 %s198, 4
          %s200 = int_to_ptr.hbm [resolvable:$true] %s199
          %s201 = sshll.u32 %s191, 4
          %s202 = int_to_ptr.vmem [resolvable:$true] %s201
          %207 = dma.hbm_to_vmem [thread:$0]  %s200, 4096, %s202, %s188, 256, 128, 8
        $region24: #{tpu_custom_call.1} parent=19 // pred_fallthru
          _
        // Predicated region
        $region25: #{tpu_custom_call.1} parent=19 // pred_check
          %p208 = pneg %p111
        $region26: #{tpu_custom_call.1} parent=19 // pred_check_branch
          %210 = sbr.rel (%p208) target = $region28
        $region27: #{tpu_custom_call.1} parent=19 // pred_region
          %s211 = sand.u32 %s16, 1
          %s212 = scalar_lea.sflag [#allocation6], %s211
          %s213 = sand.u32 %s101, 1
          %s214 = scalar_lea.vmem [#allocation7], %s213
          %216 = vsyncadd %s212, 0
          %s217 = scalar_lea.hbm %s2, %s24
          %s219 = sshll.u32 %s217, 4
          %s220 = int_to_ptr.hbm [resolvable:$true] %s219
          %s221 = sshll.u32 %s214, 4
          %s222 = int_to_ptr.vmem [resolvable:$true] %s221
          %224 = dma.hbm_to_vmem [thread:$0]  %s220, 16, %s222, %s212
        $region28: #{tpu_custom_call.1} parent=19 // pred_fallthru
          _
      $region20: #{tpu_custom_call.1} parent=5 // pred_fallthru
        _
      %p225 = scmp.le.s32.totalorder 1, %s16
      %p226 = scmp.lt.s32.totalorder %s16, 3
      %p227 = pnand %p225, %p226
      %p228 = pneg %p227
      // Predicated region
      $region29: #{tpu_custom_call.1} parent=5 // pred_check
        _
      $region30: #{tpu_custom_call.1} parent=5 // pred_check_branch
        %230 = sbr.rel (%p227) target = $region32
      $region31: #{tpu_custom_call.1} parent=5 // pred_region
        %s231 = ssub.s32 %s16, 1
        // Predicated region
        $region33: #{tpu_custom_call.1} parent=31 // pred_check
          %p232 = pneg %p63
        $region34: #{tpu_custom_call.1} parent=31 // pred_check_branch
          %234 = sbr.rel (%p232) target = $region36
        $region35: #{tpu_custom_call.1} parent=31 // pred_region
          %236 = dma.done [#allocation3], 512
        $region36: #{tpu_custom_call.1} parent=31 // pred_fallthru
          _
        %s237 = sand.u32 %s21, 1
        %s238 = scalar_lea.sflag [#allocation6], %s237
        %s239 = sand.u32 %s78, 1
        %s240 = smul.addr %s239, 256
        %s241 = scalar_lea.vmem [#allocation5], %s240
        // Predicated region
        $region37: #{tpu_custom_call.1} parent=31 // pred_check
          %p242 = pneg %p91
        $region38: #{tpu_custom_call.1} parent=31 // pred_check_branch
          %244 = sbr.rel (%p242) target = $region40
        $region39: #{tpu_custom_call.1} parent=31 // pred_region
          %246 = dma.done %s238, 4096
        $region40: #{tpu_custom_call.1} parent=31 // pred_fallthru
          _
        %s247 = sand.u32 %s21, 1
        %s248 = scalar_lea.sflag [#allocation6], %s247
        %s249 = sand.u32 %s104, 1
        %s250 = scalar_lea.vmem [#allocation7], %s249
        // Predicated region
        $region41: #{tpu_custom_call.1} parent=31 // pred_check
          %p251 = pneg %p117
        $region42: #{tpu_custom_call.1} parent=31 // pred_check_branch
          %253 = sbr.rel (%p251) target = $region44
        $region43: #{tpu_custom_call.1} parent=31 // pred_region
          %255 = dma.done %s248, 16
        $region44: #{tpu_custom_call.1} parent=31 // pred_fallthru
          _
        %p256 = pneg %p63
        %p257 = pneg %p60
        %s258 = sand.u32 %s21, 1
        %s259 = scalar_lea.sflag [#allocation6], %s258
        %s260 = sand.u32 %s78, 1
        %s261 = smul.addr %s260, 256
        %s262 = scalar_lea.vmem [#allocation5], %s261
        %p263 = pneg %p91
        %p264 = pneg %p88
        %s265 = sand.u32 %s21, 1
        %s266 = scalar_lea.sflag [#allocation6], %s265
        %s267 = sand.u32 %s104, 1
        %s268 = scalar_lea.vmem [#allocation7], %s267
        %p269 = pneg %p117
        %p270 = pneg %p114
        %p271 = pneg %p145
        %p272 = pneg %p142
        %s273 = sand.u32 %s132, 1
        %s274 = scalar_lea.sflag [#allocation4], %s273
        %s275 = sand.u32 %s132, 1
        %s276 = smul.addr %s275, 16
        %s277 = scalar_lea.vmem [#allocation8], %s276
        %s278 = smul.u32 2, %s26
        %s279 = smul.u32 2, %s28
        %s280 = smul.u32 32, %s28
        %s281 = smul.u32 2, %s26
        %p282 = scmp.eq.s32.totalorder %s28, 0
        // Predicated region
        $region45: #{tpu_custom_call.1} parent=31 // pred_check
          %p283 = pneg %p282
        $region46: #{tpu_custom_call.1} parent=31 // pred_check_branch
          %285 = sbr.rel (%p283) target = $region48
        $region47: #{tpu_custom_call.1} parent=31 // pred_region
          %v286 = vld [vmem:[%s250] sm:$0x1]
          %v288 = vperm.slane %v286, 0
          %290 = vst [vmem:[%s277] sm:$0xff] %v288
          %291 = vst [vmem:[%s277 + $0x8] sm:$0xff] %v288
        $region48: #{tpu_custom_call.1} parent=31 // pred_fallthru
          _
        %v292 = vld [vmem:[%s277] sm:$0xff]
        %v293 = vld [vmem:[%s277 + $0x8] sm:$0xff]
        %v294 = vld [vmem:[#allocation2] sm:$0xff]
        %v295 = vld [vmem:[#allocation2 + $0x8] sm:$0xff]
        %v296 = vld [vmem:[#allocation2 + $0x10] sm:$0xff]
        %v297 = vld [vmem:[#allocation2 + $0x18] sm:$0xff]
        %v298 = vld [vmem:[%s241] sm:$0xff]
        %v299 = vld [vmem:[%s241 + $0x8] sm:$0xff]
        %v300 = vld [vmem:[%s241 + $0x10] sm:$0xff]
        %v301 = vld [vmem:[%s241 + $0x18] sm:$0xff]
        %v302 = vld [vmem:[%s241 + $0x20] sm:$0xff]
        %v303 = vld [vmem:[%s241 + $0x28] sm:$0xff]
        %v304 = vld [vmem:[%s241 + $0x30] sm:$0xff]
        %v305 = vld [vmem:[%s241 + $0x38] sm:$0xff]
        %v306 = vld [vmem:[%s241 + $0x40] sm:$0xff]
        %v307 = vld [vmem:[%s241 + $0x48] sm:$0xff]
        %v308 = vld [vmem:[%s241 + $0x50] sm:$0xff]
        %v309 = vld [vmem:[%s241 + $0x58] sm:$0xff]
        %v310 = vld [vmem:[%s241 + $0x60] sm:$0xff]
        %v311 = vld [vmem:[%s241 + $0x68] sm:$0xff]
        %v312 = vld [vmem:[%s241 + $0x70] sm:$0xff]
        %v313 = vld [vmem:[%s241 + $0x78] sm:$0xff]
        %v314 = vld [vmem:[%s241 + $0x80] sm:$0xff]
        %v315 = vld [vmem:[%s241 + $0x88] sm:$0xff]
        %v316 = vld [vmem:[%s241 + $0x90] sm:$0xff]
        %v317 = vld [vmem:[%s241 + $0x98] sm:$0xff]
        %v318 = vld [vmem:[%s241 + $0xa0] sm:$0xff]
        %v319 = vld [vmem:[%s241 + $0xa8] sm:$0xff]
        %v320 = vld [vmem:[%s241 + $0xb0] sm:$0xff]
        %v321 = vld [vmem:[%s241 + $0xb8] sm:$0xff]
        %v322 = vld [vmem:[%s241 + $0xc0] sm:$0xff]
        %v323 = vld [vmem:[%s241 + $0xc8] sm:$0xff]
        %v324 = vld [vmem:[%s241 + $0xd0] sm:$0xff]
        %v325 = vld [vmem:[%s241 + $0xd8] sm:$0xff]
        %v326 = vld [vmem:[%s241 + $0xe0] sm:$0xff]
        %v327 = vld [vmem:[%s241 + $0xe8] sm:$0xff]
        %v328 = vld [vmem:[%s241 + $0xf0] sm:$0xff]
        %v329 = vld [vmem:[%s241 + $0xf8] sm:$0xff]
        %330 = vmatpush.msra.mxu0 %v313
        %331 = vmatpush.msra.mxu0 %v312
        %332 = vmatpush.msra.mxu0 %v311
        %333 = vmatpush.msra.mxu0 %v310
        %334 = vmatpush.msra.mxu0 %v309
        %335 = vmatpush.msra.mxu0 %v308
        %336 = vmatpush.msra.mxu0 %v307
        %337 = vmatpush.msra.mxu0 %v306
        %338 = vmatpush.msra.mxu0 %v305
        %339 = vmatpush.msra.mxu0 %v304
        %340 = vmatpush.msra.mxu0 %v303
        %341 = vmatpush.msra.mxu0 %v302
        %342 = vmatpush.msra.mxu0 %v301
        %343 = vmatpush.msra.mxu0 %v300
        %344 = vmatpush.msra.mxu0 %v299
        %345 = vmatpush.msra.mxu0 %v298
        %346 = vmatmul.f32.gmra.mxu0 %v294
        %v347 = vpop.f32.mrf.mxu0
        %v348 = vadd.f32 0.0, %v347
        %349 = vmatmul.f32.gmra.mxu0 %v296
        %v350 = vpop.f32.mrf.mxu0
        %v351 = vadd.f32 0.0, %v350
        %352 = vdwg.mxu0
        %353 = vmatpush.msra.mxu0 %v329
        %354 = vmatpush.msra.mxu0 %v328
        %355 = vmatpush.msra.mxu0 %v327
        %356 = vmatpush.msra.mxu0 %v326
        %357 = vmatpush.msra.mxu0 %v325
        %358 = vmatpush.msra.mxu0 %v324
        %359 = vmatpush.msra.mxu0 %v323
        %360 = vmatpush.msra.mxu0 %v322
        %361 = vmatpush.msra.mxu0 %v321
        %362 = vmatpush.msra.mxu0 %v320
        %363 = vmatpush.msra.mxu0 %v319
        %364 = vmatpush.msra.mxu0 %v318
        %365 = vmatpush.msra.mxu0 %v317
        %366 = vmatpush.msra.mxu0 %v316
        %367 = vmatpush.msra.mxu0 %v315
        %368 = vmatpush.msra.mxu0 %v314
        %369 = vmatmul.f32.gmra.mxu0 %v295
        %v370 = vpop.f32.mrf.mxu0
        %v371 = vadd.f32 %v348, %v370
        %372 = vmatmul.f32.gmra.mxu0 %v297
        %v373 = vpop.f32.mrf.mxu0
        %v374 = vadd.f32 %v351, %v373
        %375 = vdwg.mxu0
        %v376 = vadd.f32 %v292, %v371
        %v377 = vadd.f32 %v293, %v374
        %378 = vst [vmem:[%s277] sm:$0xff] %v376
        %379 = vst [vmem:[%s277 + $0x8] sm:$0xff] %v377
        %s380 = sand.u32 %s132, 1
        %s381 = scalar_lea.sflag [#allocation4], %s380
        %s382 = sand.u32 %s132, 1
        %s383 = smul.addr %s382, 16
        %s384 = scalar_lea.vmem [#allocation8], %s383
        // Predicated region
        $region49: #{tpu_custom_call.1} parent=31 // pred_check
          %p385 = pneg %p142
        $region50: #{tpu_custom_call.1} parent=31 // pred_check_branch
          %387 = sbr.rel (%p385) target = $region52
        $region51: #{tpu_custom_call.1} parent=31 // pred_region
          %s388 = smul.u32 2, %s26
          %390 = vsyncadd %s381, 0
          %s391 = smul.addr %s388, 2
          %s392 = sadd.s32 %s27, %s391
          %s393 = smul.addr %s392, 8
          %s394 = scalar_lea.hbm %s3, %s393
          %s395 = sshll.u32 %s384, 4
          %s396 = int_to_ptr.vmem [resolvable:$true] %s395
          %s397 = sshll.u32 %s394, 4
          %s398 = int_to_ptr.hbm [resolvable:$true] %s397
          %403 = dma.vmem_to_hbm [thread:$0]  %s396, 256, %s398, %s381, 128, 256, 8
        $region52: #{tpu_custom_call.1} parent=31 // pred_fallthru
          _
      $region32: #{tpu_custom_call.1} parent=5 // pred_fallthru
        _
      %p404 = scmp.le.s32.totalorder 2, %s16
      // Predicated region
      $region53: #{tpu_custom_call.1} parent=5 // pred_check
        %p405 = pneg %p404
      $region54: #{tpu_custom_call.1} parent=5 // pred_check_branch
        %407 = sbr.rel (%p405) target = $region56
      $region55: #{tpu_custom_call.1} parent=5 // pred_region
        %s408 = ssub.s32 %s16, 2
        // Predicated region
        $region57: #{tpu_custom_call.1} parent=55 // pred_check
          %p409 = pneg %p148
        $region58: #{tpu_custom_call.1} parent=55 // pred_check_branch
          %411 = sbr.rel (%p409) target = $region60
        $region59: #{tpu_custom_call.1} parent=55 // pred_region
          %s412 = sand.u32 %s133, 1
          %s413 = scalar_lea.sflag [#allocation4], %s412
          %s414 = sand.u32 %s133, 1
          %s415 = smul.addr %s414, 16
          %s416 = scalar_lea.vmem [#allocation8], %s415
          %418 = dma.done %s413, 256
        $region60: #{tpu_custom_call.1} parent=55 // pred_fallthru
          _
      $region56: #{tpu_custom_call.1} parent=5 // pred_fallthru
        _
    $region6: #{tpu_custom_call.1} parent=1 // loop_footer
      %s20 = sadd.s32 1, %s16
    $region7: #{tpu_custom_call.1} parent=1 // loop_footer_branch
      %15 = sbr.rel target = $region3
    $region8: #{tpu_custom_call.1} parent=1 // loop_exit
      _
    %419 = vsyncpa [#allocation3], 1
    %s420 = scalar_lea.sflag [#allocation3], 1
    %421 = vsyncpa %s420, 1
    %422 = vsyncpa [#allocation6], 1
    %s423 = scalar_lea.sflag [#allocation6], 1
    %424 = vsyncpa %s423, 1
    %425 = vsyncpa [#allocation4], 1
    %s426 = scalar_lea.sflag [#allocation4], 1
    %427 = vsyncpa %s426, 1

</llo_original>
